<compile_context>
chip_gen: v7x
topology: tpu7x:2x2x1
jax: 0.10.0
libtpu: 0.0.40
codegen_flags: <defaults>
</compile_context>

<pallas_src>
import functools

import jax
import jax.numpy as jnp
from jax.experimental import pallas as pl
from jax.experimental.pallas import tpu as pltpu


def _int_pow(base, n):
    """base ** n for a non-negative Python int n, as plain VPU multiplies."""
    if n == 0:
        return jnp.ones_like(base)
    result = None
    cur = base
    while n > 0:
        if n & 1:
            result = cur if result is None else result * cur
        n >>= 1
        if n:
            cur = cur * cur
    return result


def _focal_loss_kernel(logit_ref, target_ref, out_ref, acc_ref, *,
                       gamma, batch, tile_b, n_inner, group):
    p = pl.program_id(0)          # parallel batch-chunk (maps across TCs on v7x)
    j = pl.program_id(1)          # sequential tile within the chunk

    @pl.when(j == 0)
    def _():
        acc_ref[...] = jnp.zeros_like(acc_ref)

    x = logit_ref[...].astype(jnp.float32)
    t = target_ref[...].astype(jnp.float32)

    # Rows past the real batch (tail / over-shot tiles) must contribute 0.
    row = (p * n_inner + j) * tile_b + jax.lax.broadcasted_iota(
        jnp.int32, x.shape, 0)
    valid = row < batch
    x = jnp.where(valid, x, 0.0)
    t = jnp.where(valid, t, 0.0)

    # BCE-with-logits, exact rewrite of the torch expression
    #   x - x*t + max(-x,0) + log(exp(-max_val) + exp(-x - max_val))
    # == max(x,0) - x*t + log1p(exp(-|x|))
    bce = jnp.maximum(x, 0.0) - x * t + jnp.log1p(jnp.exp(-jnp.abs(x)))

    # Focal modulation: exp(gamma * logsigmoid(-x*(2t-1))) == sigmoid(z)**gamma
    # with z = x*(1-2t)  (exact identity, valid for soft targets too).
    z = x * (1.0 - 2.0 * t)
    ez = jnp.exp(-jnp.abs(z))
    if float(gamma) == int(gamma) and gamma >= 0:
        # Integer gamma (default 2): no extra log/exp on the EUP.
        sig = jnp.where(z >= 0.0, 1.0, ez) / (1.0 + ez)   # stable sigmoid(z)
        mod = _int_pow(sig, int(gamma))
    else:
        # General gamma: numerically stable logsigmoid path.
        invprobs = jnp.minimum(z, 0.0) - jnp.log1p(ez)
        mod = jnp.exp(gamma * invprobs)

    loss = jnp.where(valid, mod * bce, 0.0)

    # Row-group tree reduction (tile_b, C) -> (group, C): static sublane-aligned
    # slices + VPU adds only (no XLU), tiny accumulator, small write traffic.
    parts = [loss[i * group:(i + 1) * group, :] for i in range(tile_b // group)]
    while len(parts) > 1:
        nxt = [a + b for a, b in zip(parts[0::2], parts[1::2])]
        if len(parts) % 2:
            nxt.append(parts[-1])
        parts = nxt
    acc_ref[...] += parts[0]

    @pl.when(j == n_inner - 1)
    def _():
        # Single cross-lane reduction + scalar SMEM write per chunk.
        out_ref[0, 0] = jnp.sum(acc_ref[...])


def focal_loss(logit, target, gamma=2, tile_b=None):
    """Pallas implementation of FocalLoss.forward for 2-D [B, C] inputs."""
    B, C = logit.shape
    bpe = max(jnp.dtype(logit.dtype).itemsize, jnp.dtype(target.dtype).itemsize)

    if tile_b is None:
        # ~4 MiB per input tile; 2 inputs x 2 pipeline buffers ~= 16 MiB VMEM,
        # comfortable on v7x (64 MiB) and v5e/v6e (128 MiB), while tiles of
        # >=512 rows amortize the ~0.35 us per-grid-step overhead.
        max_rows = max(8, (((4 << 20) // (C * bpe)) // 8) * 8)
        tile_b = min(512, max_rows)
    if B <= tile_b:
        tile_b = B if B < 8 else (B // 8) * 8

    # Accumulator row-group: 8 sublanes when the tile is sublane-aligned,
    # else fall back to a full-tile accumulator (tiny-batch case).
    group = 8 if (tile_b >= 8 and tile_b % 8 == 0) else tile_b

    total_tiles = pl.cdiv(B, tile_b)
    n_par = 2 if total_tiles >= 2 else 1        # feed both TensorCores on v7x
    n_inner = pl.cdiv(total_tiles, n_par)

    def idx_map(p, j):
        # Over-shot tiles (fully masked in-kernel) re-read the last real block
        # so the block index never leaves the array.
        return (jnp.minimum(p * n_inner + j, total_tiles - 1), 0)

    kernel = functools.partial(
        _focal_loss_kernel, gamma=float(gamma), batch=B,
        tile_b=tile_b, n_inner=n_inner, group=group)

    tile_bytes = tile_b * C * bpe
    vmem_limit = int(min(64 << 20, max(32 << 20, 6 * tile_bytes)))

    partials = pl.pallas_call(
        kernel,
        out_shape=jax.ShapeDtypeStruct((n_par, 1), jnp.float32),
        grid_spec=pltpu.PrefetchScalarGridSpec(
            num_scalar_prefetch=0,
            grid=(n_par, n_inner),
            in_specs=[
                pl.BlockSpec((tile_b, C), idx_map),
                pl.BlockSpec((tile_b, C), idx_map),
            ],
            out_specs=pl.BlockSpec((1, 1), lambda p, j: (p, 0),
                                   memory_space=pltpu.SMEM),
            scratch_shapes=[pltpu.VMEM((group, C), jnp.float32)],
        ),
        compiler_params=pltpu.CompilerParams(
            dimension_semantics=("parallel", "arbitrary"),
            vmem_limit_bytes=vmem_limit,
        ),
    )(logit, target)

    # (sum over classes, then mean over batch) == grand total / B.
    return jnp.sum(partials) / jnp.float32(B)


def _focal_loss_ref(logit, target, gamma=2):
    # Pure-JAX reference mirroring the PyTorch forward exactly.
    x = logit.astype(jnp.float32)
    t = target.astype(jnp.float32)
    max_val = jnp.maximum(-x, 0.0)
    loss = x - x * t + max_val + jnp.log(jnp.exp(-max_val) + jnp.exp(-x - max_val))
    invprobs = jax.nn.log_sigmoid(-x * (t * 2.0 - 1.0))
    loss = jnp.exp(invprobs * gamma) * loss
    loss = loss.sum(axis=1)
    return loss.mean()


if __name__ == "__main__":
    key = jax.random.PRNGKey(0)
    k1, k2, k3, k4 = jax.random.split(key, 4)

    # Case 1: small, evenly tiled batch.
    B, C = 8, 128
    logit = jax.random.normal(k1, (B, C), dtype=jnp.float32) * 3.0
    target = (jax.random.uniform(k2, (B, C)) < 0.3).astype(jnp.float32)
    out = jax.block_until_ready(focal_loss(logit, target, gamma=2))
    ref = _focal_loss_ref(logit, target, gamma=2)
    assert jnp.allclose(out, ref, rtol=1e-5, atol=1e-5), (out, ref)

    # Case 2: ragged batch -> tail masking + 2-chunk parallel split.
    B2, C2 = 20, 128
    logit2 = jax.random.normal(k3, (B2, C2), dtype=jnp.float32) * 3.0
    target2 = (jax.random.uniform(k4, (B2, C2)) < 0.3).astype(jnp.float32)
    out2 = jax.block_until_ready(focal_loss(logit2, target2, gamma=2, tile_b=8))
    ref2 = _focal_loss_ref(logit2, target2, gamma=2)
    assert jnp.allclose(out2, ref2, rtol=1e-5, atol=1e-5), (out2, ref2)

    print("KERNEL_OK")
</pallas_src>

<mosaic_0001>
module attributes {stable_mosaic.version = 11 : i64} {
  func.func @_focal_loss_kernel(%arg0: i32, %arg1: i32, %arg2: memref<8x128xf32, #tpu.memory_space<vmem>>, %arg3: memref<8x128xf32, #tpu.memory_space<vmem>>, %arg4: memref<1x1xf32, #tpu.memory_space<smem>>, %arg5: memref<8x128xf32, #tpu.memory_space<vmem>>) attributes {dimension_semantics = [#tpu.dimension_semantics<parallel>, #tpu.dimension_semantics<arbitrary>], iteration_bounds = array<i64: 1, 1>, scalar_prefetch = 0 : i64, scratch_operands = 1 : i64, tpu.core_type = #tpu.core_type<tc>, window_params = [{transform_indices = @transform_0, window_bounds = array<i64: 8, 128>}, {transform_indices = @transform_1, window_bounds = array<i64: 8, 128>}, {transform_indices = @transform_2, window_bounds = array<i64: 1, 1>}]} {
    %c0_i32 = arith.constant 0 : i32
    %0 = arith.cmpi eq, %arg1, %c0_i32 : i32
    %1 = arith.extui %0 : i1 to i32
    %c0_i32_0 = arith.constant 0 : i32
    %2 = arith.cmpi ne, %1, %c0_i32_0 : i32
    scf.if %2 {
      %cst_21 = arith.constant 0.000000e+00 : f32
      %53 = vector.broadcast %cst_21 : f32 to vector<8x128xf32>
      %c0_22 = arith.constant 0 : index
      %c0_23 = arith.constant 0 : index
      %54 = vector.load %arg5[%c0_22, %c0_23] : memref<8x128xf32, #tpu.memory_space<vmem>>, vector<8x128xf32>
      tpu.vector_store %arg5[%c0_22, %c0_23], %53 {strides = array<i32>} : memref<8x128xf32, #tpu.memory_space<vmem>>, vector<8x128xf32>,
    } else {
    }
    %c0 = arith.constant 0 : index
    %c0_1 = arith.constant 0 : index
    %3 = vector.load %arg2[%c0, %c0_1] : memref<8x128xf32, #tpu.memory_space<vmem>>, vector<8x128xf32>
    %c0_2 = arith.constant 0 : index
    %c0_3 = arith.constant 0 : index
    %4 = vector.load %arg3[%c0_2, %c0_3] : memref<8x128xf32, #tpu.memory_space<vmem>>, vector<8x128xf32>
    %c1_i32 = arith.constant 1 : i32
    %5 = arith.muli %arg0, %c1_i32 : i32
    %6 = arith.addi %5, %arg1 : i32
    %c8_i32 = arith.constant 8 : i32
    %7 = arith.muli %6, %c8_i32 : i32
    %8 = tpu.iota {dimensions = array<i32: 0>} : vector<8x128xi32>
    %9 = vector.broadcast %7 : i32 to vector<8x128xi32>
    %10 = arith.addi %9, %8 : vector<8x128xi32>
    %c8_i32_4 = arith.constant 8 : i32
    %11 = vector.broadcast %c8_i32_4 : i32 to vector<8x128xi32>
    %12 = arith.cmpi slt, %10, %11 : vector<8x128xi32>
    %cst = arith.constant 0.000000e+00 : f32
    %13 = vector.broadcast %cst : f32 to vector<8x128xf32>
    %14 = arith.select %12, %3, %13 : vector<8x128xi1>, vector<8x128xf32>
    %cst_5 = arith.constant 0.000000e+00 : f32
    %15 = vector.broadcast %cst_5 : f32 to vector<8x128xf32>
    %16 = arith.select %12, %4, %15 : vector<8x128xi1>, vector<8x128xf32>
    %cst_6 = arith.constant 0.000000e+00 : f32
    %17 = vector.broadcast %cst_6 : f32 to vector<8x128xf32>
    %18 = arith.maximumf %14, %17 : vector<8x128xf32>
    %19 = arith.mulf %14, %16 : vector<8x128xf32>
    %20 = arith.subf %18, %19 : vector<8x128xf32>
    %21 = math.absf %14 : vector<8x128xf32>
    %cst_7 = arith.constant 0.000000e+00 : f32
    %22 = vector.broadcast %cst_7 : f32 to vector<8x128xf32>
    %23 = arith.subf %22, %21 : vector<8x128xf32>
    %24 = math.exp %23 : vector<8x128xf32>
    %25 = math.log1p %24 : vector<8x128xf32>
    %26 = arith.addf %20, %25 : vector<8x128xf32>
    %cst_8 = arith.constant 2.000000e+00 : f32
    %27 = vector.broadcast %cst_8 : f32 to vector<8x128xf32>
    %28 = arith.mulf %27, %16 : vector<8x128xf32>
    %cst_9 = arith.constant 1.000000e+00 : f32
    %29 = vector.broadcast %cst_9 : f32 to vector<8x128xf32>
    %30 = arith.subf %29, %28 : vector<8x128xf32>
    %31 = arith.mulf %14, %30 : vector<8x128xf32>
    %32 = math.absf %31 : vector<8x128xf32>
    %cst_10 = arith.constant 0.000000e+00 : f32
    %33 = vector.broadcast %cst_10 : f32 to vector<8x128xf32>
    %34 = arith.subf %33, %32 : vector<8x128xf32>
    %35 = math.exp %34 : vector<8x128xf32>
    %cst_11 = arith.constant 0.000000e+00 : f32
    %36 = vector.broadcast %cst_11 : f32 to vector<8x128xf32>
    %37 = arith.cmpf oge, %31, %36 : vector<8x128xf32>
    %cst_12 = arith.constant 1.000000e+00 : f32
    %38 = vector.broadcast %cst_12 : f32 to vector<8x128xf32>
    %39 = arith.select %37, %38, %35 : vector<8x128xi1>, vector<8x128xf32>
    %cst_13 = arith.constant 1.000000e+00 : f32
    %40 = vector.broadcast %cst_13 : f32 to vector<8x128xf32>
    %41 = arith.addf %40, %35 : vector<8x128xf32>
    %42 = arith.divf %39, %41 : vector<8x128xf32>
    %43 = arith.mulf %42, %42 : vector<8x128xf32>
    %44 = arith.mulf %43, %26 : vector<8x128xf32>
    %cst_14 = arith.constant 0.000000e+00 : f32
    %45 = vector.broadcast %cst_14 : f32 to vector<8x128xf32>
    %46 = arith.select %12, %44, %45 : vector<8x128xi1>, vector<8x128xf32>
    %c0_15 = arith.constant 0 : index
    %c0_16 = arith.constant 0 : index
    %47 = vector.load %arg5[%c0_15, %c0_16] : memref<8x128xf32, #tpu.memory_space<vmem>>, vector<8x128xf32>
    %48 = arith.addf %47, %46 : vector<8x128xf32>
    %c0_17 = arith.constant 0 : index
    %c0_18 = arith.constant 0 : index
    %49 = vector.load %arg5[%c0_17, %c0_18] : memref<8x128xf32, #tpu.memory_space<vmem>>, vector<8x128xf32>
    tpu.vector_store %arg5[%c0_17, %c0_18], %48 {strides = array<i32>} : memref<8x128xf32, #tpu.memory_space<vmem>>, vector<8x128xf32>,
    %c0_i32_19 = arith.constant 0 : i32
    %50 = arith.cmpi eq, %arg1, %c0_i32_19 : i32
    %51 = arith.extui %50 : i1 to i32
    %c0_i32_20 = arith.constant 0 : i32
    %52 = arith.cmpi ne, %51, %c0_i32_20 : i32
    scf.if %52 {
      %c0_21 = arith.constant 0 : index
      %c0_22 = arith.constant 0 : index
      %53 = vector.load %arg5[%c0_21, %c0_22] : memref<8x128xf32, #tpu.memory_space<vmem>>, vector<8x128xf32>
      %54 = vector.shape_cast %53 : vector<8x128xf32> to vector<1x8x128xf32>
      %cst_23 = arith.constant dense<0.000000e+00> : vector<1xf32>
      %55 = vector.multi_reduction <add>, %54, %cst_23 [1, 2] : vector<1x8x128xf32> to vector<1xf32>
      %56 = vector.shape_cast %55 : vector<1xf32> to vector<1x1x1xf32>
      %57 = vector.extract %56[0, 0, 0] : f32 from vector<1x1x1xf32>
      %c0_24 = arith.constant 0 : index
      %c0_25 = arith.constant 0 : index
      %58 = memref.load %arg4[%c0_24, %c0_25] : memref<1x1xf32, #tpu.memory_space<smem>>
      memref.store %57, %arg4[%c0_24, %c0_25] : memref<1x1xf32, #tpu.memory_space<smem>>
    } else {
    }
    return
  }
  func.func @transform_0(%arg0: i32, %arg1: i32) -> (i32, i32) {
    %c1_i32 = arith.constant 1 : i32
    %0 = arith.muli %arg0, %c1_i32 : i32
    %1 = arith.addi %0, %arg1 : i32
    %c0_i32 = arith.constant 0 : i32
    %2 = arith.minsi %1, %c0_i32 : i32
    %c0_i32_0 = arith.constant 0 : i32
    %c0_i32_1 = arith.constant 0 : i32
    return %2, %c0_i32_0 : i32, i32
  }
  func.func @transform_1(%arg0: i32, %arg1: i32) -> (i32, i32) {
    %c1_i32 = arith.constant 1 : i32
    %0 = arith.muli %arg0, %c1_i32 : i32
    %1 = arith.addi %0, %arg1 : i32
    %c0_i32 = arith.constant 0 : i32
    %2 = arith.minsi %1, %c0_i32 : i32
    %c0_i32_0 = arith.constant 0 : i32
    %c0_i32_1 = arith.constant 0 : i32
    return %2, %c0_i32_0 : i32, i32
  }
  func.func @transform_2(%arg0: i32, %arg1: i32) -> (i32, i32) {
    %c0_i32 = arith.constant 0 : i32
    %c0_i32_0 = arith.constant 0 : i32
    return %arg0, %c0_i32 : i32, i32
  }
}

</mosaic_0001>

<llo_original>
// kernel: tpu_custom_call.1
$region0: #{tpu_custom_call.1}
  #allocation0 [shape = 'u32[]', space=smem, size = 0x4, offset = 0x4, fixed_abs, tag = 'smem constant byte address 0x4 - core index']
  #allocation1 [shape = 'u32[144,128]{1,0:T(1,128)}', space=vmem, size = 0x12000, scoped, tag = 'internal scratch']
  #allocation2 [shape = 'f32[8,128]{1,0:T(8,128)}', space=vmem, size = 0x1000, scoped, tag = 'scratch operand']
  %s0 = inlined_call_operand.hbm [shape: f32[8,128], index: 0, kind: input, shape index: {}]
  %s1 = inlined_call_operand.hbm [shape: f32[8,128], index: 1, kind: input, shape index: {}]
  %s2 = inlined_call_operand.hbm [shape: f32[1,1], index: 2, kind: output, shape index: {}]
  %s3 = sld [smem:[#allocation0]]
  $region34: #{tpu_custom_call.1} parent=0
    _
  %s5 = ssub.s32 1, %s3
  %s6 = scalar_select 0, %s5, %s3
  $region1: #{tpu_custom_call.1} parent=0
    #allocation3 [shape = 'u8[4096]{0}', space=vmem, size = 0x1000, scoped, tag = 'input window, operand 0, single buffered']
    #allocation4 [shape = 's32[1]{0}', space=sflag, size = 0x4, scoped, tag = 'scoped memory for tpu_custom_call.1']
    #allocation5 [shape = 's32[1]{0}', space=sflag, size = 0x4, scoped, tag = 'scoped memory for tpu_custom_call.1']
    #allocation6 [shape = 'u8[4096]{0}', space=vmem, size = 0x1000, scoped, tag = 'input window, operand 1, single buffered']
    #allocation7 [shape = 's32[1]{0}', space=sflag, size = 0x4, scoped, tag = 'scoped memory for tpu_custom_call.1']
    #allocation8 [shape = 'u8[512]{0}', space=smem, size = 0x200, scoped, tag = 'output window, operand 0, single buffered']
    %7 = vsyncpa [#allocation4], 0
    %8 = vsyncpa [#allocation7], 0
    %9 = vsyncpa [#allocation5], 0
    // Predicated region
    $region2: #{tpu_custom_call.1} parent=1 // pred_check
      _
    $region3: #{tpu_custom_call.1} parent=1 // pred_check_branch
      %11 = sbr.rel (0) target = $region5
    $region4: #{tpu_custom_call.1} parent=1 // pred_region
      %s12 = sadd.s32 0, 0
      %p13 = scmp.lt.s32.totalorder %s12, 0
      %s14 = scalar_select %p13, %s12, 0
      %s16 = ssub.s32 128, 128
      %17 = vsyncadd [#allocation4], %s16
      %s18 = smul.addr %s14, 128
      %s19 = scalar_lea.hbm %s0, %s18
      %s21 = sshll.u32 [#allocation3], 4
      %s22 = int_to_ptr.vmem [resolvable:$true] %s21
      %24 = dma.hbm_to_vmem [thread:$0]  %s19, 128, %s22, [#allocation4]
    $region5: #{tpu_custom_call.1} parent=1 // pred_fallthru
      _
    // Predicated region
    $region6: #{tpu_custom_call.1} parent=1 // pred_check
      _
    $region7: #{tpu_custom_call.1} parent=1 // pred_check_branch
      %26 = sbr.rel (0) target = $region9
    $region8: #{tpu_custom_call.1} parent=1 // pred_region
      %s27 = sadd.s32 0, 0
      %p28 = scmp.lt.s32.totalorder %s27, 0
      %s29 = scalar_select %p28, %s27, 0
      %s31 = ssub.s32 128, 128
      %32 = vsyncadd [#allocation7], %s31
      %s33 = smul.addr %s29, 128
      %s34 = scalar_lea.hbm %s1, %s33
      %s36 = sshll.u32 [#allocation6], 4
      %s37 = int_to_ptr.vmem [resolvable:$true] %s36
      %39 = dma.hbm_to_vmem [thread:$0]  %s34, 128, %s37, [#allocation7]
    $region9: #{tpu_custom_call.1} parent=1 // pred_fallthru
      _
    // Predicated region
    $region10: #{tpu_custom_call.1} parent=1 // pred_check
      _
    $region11: #{tpu_custom_call.1} parent=1 // pred_check_branch
      %41 = sbr.rel (0) target = $region13
    $region12: #{tpu_custom_call.1} parent=1 // pred_region
      %42 = dma.done [#allocation4], 128
    $region13: #{tpu_custom_call.1} parent=1 // pred_fallthru
      _
    // Predicated region
    $region14: #{tpu_custom_call.1} parent=1 // pred_check
      _
    $region15: #{tpu_custom_call.1} parent=1 // pred_check_branch
      %44 = sbr.rel (0) target = $region17
    $region16: #{tpu_custom_call.1} parent=1 // pred_region
      %45 = dma.done [#allocation7], 128
    $region17: #{tpu_custom_call.1} parent=1 // pred_fallthru
      _
    %s46 = sadd.s32 0, 0
    %p47 = scmp.lt.s32.totalorder %s46, 0
    %s48 = scalar_select %p47, %s46, 0
    %s49 = sadd.s32 0, 0
    %p50 = scmp.lt.s32.totalorder %s49, 0
    %s51 = scalar_select %p50, %s49, 0
    %p52 = scmp.eq.s32.totalorder 0, 0
    // Predicated region
    $region18: #{tpu_custom_call.1} parent=1 // pred_check
      %p53 = pneg %p52
    $region19: #{tpu_custom_call.1} parent=1 // pred_check_branch
      %55 = sbr.rel (%p53) target = $region21
    $region20: #{tpu_custom_call.1} parent=1 // pred_region
      %56 = vst [vmem:[#allocation2] sm:$0xff] 0.0
    $region21: #{tpu_custom_call.1} parent=1 // pred_fallthru
      _
    %v57 = vld [vmem:[#allocation3] sm:$0xff]
    %v58 = vld [vmem:[#allocation6] sm:$0xff]
    %s59 = sadd.s32 0, 0
    %s60 = smul.u32 %s59, 8
    %v61 = vlaneseq
    %v62 = vshrl.u32 %v61, 7
    %v63 = vstv %s60
    %v64 = vadd.s32 %v63, %v62
    %vm65 = vcmp.lt.s32.totalorder %v64, 8
    %v66 = vsel %vm65, %v57, 0.0
    %v67 = vsel %vm65, %v58, 0.0
    %v68 = vmax.f32 %v66, 0.0
    %v69 = vmul.f32 %v66, %v67
    %v70 = vsub.f32 %v68, %v69
    %v71 = vand.u32 2147483647, %v66
    %v72 = vsub.f32 0.0, %v71
    %v73 = vmul.f32 %v72, 1.442695
    %v74 = vpow.pop %v73
    %v75 = vadd.f32 %v74, 1.0
    %v76 = vlog2.pop %v75
    %v77 = vmul.f32 %v76, 0.6931472
    %v78 = vmul.f32 -0.5, %v74
    %v79 = vadd.f32 %v78, 1.0
    %v80 = vmul.f32 %v79, %v74
    %v81 = vand.u32 2147483647, %v74
    %vm82 = vcmp.lt.f32.partialorder %v81, 0.0004427343
    %v83 = vsel %vm82, %v80, %v77
    %v84 = vadd.f32 %v70, %v83
    %v85 = vmul.f32 %v67, 2.0
    %v86 = vsub.f32 1.0, %v85
    %v87 = vmul.f32 %v66, %v86
    %v88 = vand.u32 2147483647, %v87
    %v89 = vsub.f32 0.0, %v88
    %v90 = vmul.f32 %v89, 1.442695
    %v91 = vpow.pop %v90
    %vm92 = vcmp.ge.f32.partialorder %v87, 0.0
    %v93 = vsel %vm92, 1.0, %v91
    %v94 = vadd.f32 %v91, 1.0
    %v95 = vrcp.pop %v94
    %v96 = vmul.f32 %v93, %v95
    %v97 = vmul.f32 %v96, %v96
    %v98 = vmul.f32 %v97, %v84
    %v99 = vsel %vm65, %v98, 0.0
    %v100 = vld [vmem:[#allocation2] sm:$0xff]
    %v101 = vadd.f32 %v100, %v99
    %102 = vst [vmem:[#allocation2] sm:$0xff] %v101
    // Predicated region
    $region22: #{tpu_custom_call.1} parent=1 // pred_check
      %p103 = pneg %p52
    $region23: #{tpu_custom_call.1} parent=1 // pred_check_branch
      %105 = sbr.rel (%p103) target = $region25
    $region24: #{tpu_custom_call.1} parent=1 // pred_region
      %v106 = vld [vmem:[#allocation2] sm:$0xff]
      %107 = vadd.xlane.f32.xlu0 %v106
      %v108 = vpop.xlane.xlu0 %107
      %v109 = vrot.slane %v108, 4
      %v110 = vadd.f32 %v108, %v109
      %v111 = vrot.slane %v110, 2
      %v112 = vadd.f32 %v110, %v111
      %v113 = vrot.slane %v112, 1
      %v114 = vadd.f32 %v112, %v113
      %s115 = vtos %v114
      %s116 = scalar_lea.smem [#allocation8], 0
      %117 = sst [smem:[%s116]] %s115
    $region25: #{tpu_custom_call.1} parent=1 // pred_fallthru
      _
    // Predicated region
    $region26: #{tpu_custom_call.1} parent=1 // pred_check
      _
    $region27: #{tpu_custom_call.1} parent=1 // pred_check_branch
      %119 = sbr.rel (0) target = $region29
    $region28: #{tpu_custom_call.1} parent=1 // pred_region
      %s121 = ssub.s32 16, 16
      %122 = vsyncadd [#allocation5], %s121
      %125 = dma.smem_to_hbm [#allocation8], 16, %s2, [#allocation5]
    $region29: #{tpu_custom_call.1} parent=1 // pred_fallthru
      _
    // Predicated region
    $region30: #{tpu_custom_call.1} parent=1 // pred_check
      _
    $region31: #{tpu_custom_call.1} parent=1 // pred_check_branch
      %127 = sbr.rel (0) target = $region33
    $region32: #{tpu_custom_call.1} parent=1 // pred_region
      %128 = dma.done [#allocation5], 16
    $region33: #{tpu_custom_call.1} parent=1 // pred_fallthru
      _
    %129 = sfence
    %130 = vsyncpa [#allocation4], 1
    %131 = vsyncpa [#allocation7], 1
    %132 = vsyncpa [#allocation5], 1

</llo_original>
